<compile_context>
chip_gen: v6e
topology: v6e:2x2x1
jax: 0.10.0
libtpu: 0.0.40
codegen_flags: <defaults>
</compile_context>

<pallas_src>
import functools

import jax
import jax.numpy as jnp
from jax.experimental import pallas as pl
from jax.experimental.pallas import tpu as pltpu


def _round_up(x, m):
    return (x + m - 1) // m * m


def _cdiv(a, b):
    return (a + b - 1) // b


def _vmem_capacity_bytes():
    """Physical VMEM per TensorCore; conservative 64 MiB (v7x) if unknown."""
    try:
        cap = getattr(pltpu.get_tpu_info(), "vmem_capacity_bytes", None)
        if cap:
            return int(cap)
    except Exception:
        pass
    return 64 * 2 ** 20


# ---------------------------------- kernels ----------------------------------

def _layernorm_f32(x, gamma, beta, eps):
    # PyTorch LayerNorm in the spec: unbiased std (N-1 divisor), eps added to std.
    d = x.shape[-1]
    mean = jnp.mean(x, axis=-1, keepdims=True)
    diff = x - mean
    var_unbiased = jnp.sum(diff * diff, axis=-1, keepdims=True) * (1.0 / (d - 1))
    inv = pl.reciprocal(jnp.sqrt(var_unbiased) + eps)  # exact; approx=True -> EUP
    return (gamma * diff) * inv + beta


def _kernel_resident(x_ref, gamma_ref, beta_ref, w_ref, b_ref, o_ref, *, eps):
    """W fully VMEM-resident (DMA'd once for the whole kernel); grid = (row_tiles,)."""
    x = x_ref[...].astype(jnp.float32)
    y = _layernorm_f32(x, gamma_ref[...].astype(jnp.float32),
                       beta_ref[...].astype(jnp.float32), eps)
    y = y.astype(w_ref.dtype)
    # residual + bias folded straight into the result; dropout = identity (eval).
    # TODO(synk): training-mode dropout (Bernoulli mask via pltpu.prng_*) not implemented.
    res = x + b_ref[...].astype(jnp.float32) + jnp.dot(
        y, w_ref[...], preferred_element_type=jnp.float32)
    o_ref[...] = res.astype(o_ref.dtype)


def _kernel_streamed(x_ref, gamma_ref, beta_ref, w_ref, b_ref, o_ref,
                     y_ref, acc_ref, *, eps):
    """W streamed in K-slabs over the reduction axis; grid = (row_tiles, nk), nk >= 2."""
    k = pl.program_id(1)
    nk_m1, _, tk = y_ref.shape      # static ints at trace time

    @pl.when(k == 0)
    def _init():
        x = x_ref[...].astype(jnp.float32)
        y = _layernorm_f32(x, gamma_ref[...].astype(jnp.float32),
                           beta_ref[...].astype(jnp.float32), eps)
        y = y.astype(y_ref.dtype)
        for kk in range(nk_m1):                 # stash chunks 1..nk-1 for later steps
            y_ref[kk] = y[:, (kk + 1) * tk:(kk + 2) * tk]
        # Residual + bias folded into the accumulator; first K slab issued straight
        # from registers (no (tm, tk) store->load round trip for chunk 0).
        acc_ref[...] = x + b_ref[...].astype(jnp.float32) + jnp.dot(
            y[:, :tk], w_ref[...], preferred_element_type=jnp.float32)

    @pl.when(k > 0)
    def _accum():
        acc_ref[...] += jnp.dot(y_ref[k - 1], w_ref[...],
                                preferred_element_type=jnp.float32)

    @pl.when(k == pl.num_programs(1) - 1)
    def _finalize():
        o_ref[...] = acc_ref[...].astype(o_ref.dtype)


# ---------------------------------- wrapper ----------------------------------

def sublayer_connection(x, gamma, beta, w, b, *, eps=1e-6, tile_rows=256,
                        max_k_tile=512, matmul_dtype=None, w_resident=None,
                        vmem_budget_bytes=None):
    """x: [B, S, D]. Returns x + Linear(LayerNorm(x)) (dropout in eval mode)."""
    B, S, D = x.shape
    N = B * S
    if matmul_dtype is None:
        # Set jnp.bfloat16 on v6e/v7x for full-rate MXU + half the W bytes/VMEM;
        # LayerNorm statistics and the accumulator always stay f32 in-kernel.
        matmul_dtype = x.dtype

    ito = jnp.dtype(x.dtype).itemsize
    itm = jnp.dtype(matmul_dtype).itemsize

    x2 = x.reshape(N, D)
    gamma2 = gamma.reshape(1, D).astype(jnp.float32)
    beta2 = beta.reshape(1, D).astype(jnp.float32)
    b2 = b.reshape(1, D).astype(jnp.float32)
    w2 = w.astype(matmul_dtype)

    # Per-generation VMEM budget (~3/4 of physical: ~96 MiB v5e/v6e, ~48 MiB v7x).
    budget = int(vmem_budget_bytes or _vmem_capacity_bytes() * 3 // 4)
    param_bytes = 3 * D * 4
    w_bytes = D * D * itm

    # Row tiling: large multiple-of-8 tile; keep >= 2 row tiles for megacore sharding.
    tm = min(_round_up(tile_rows, 8), _round_up(N, 8))
    while _cdiv(N, tm) < 2 and tm > 8:
        tm = max(8, _round_up(tm // 2, 8))

    # W resident (DMA'd once) vs streamed in K-slabs (re-read per row tile).
    if w_resident is None:
        w_resident = (w_bytes <= budget // 3) or (D % 128 != 0)
    # TODO(synk): for very large non-128-aligned D the resident fallback can exceed the
    # VMEM budget; an output-column (tn) grid axis would restore feasibility there.

    if w_resident:
        def est_r(tm_):
            return 4 * tm_ * D * ito + w_bytes + param_bytes
        while tm > 8 and est_r(tm) > budget:
            tm = max(8, _round_up(tm // 2, 8))
        grid = (_cdiv(N, tm),)
        in_specs = [
            pl.BlockSpec((tm, D), lambda i: (i, 0)),
            pl.BlockSpec((1, D), lambda i: (0, 0), pipeline_mode=pl.Buffered(1)),  # gamma
            pl.BlockSpec((1, D), lambda i: (0, 0), pipeline_mode=pl.Buffered(1)),  # beta
            # Constant block index + single buffer => W DMA'd exactly once.
            pl.BlockSpec((D, D), lambda i: (0, 0), pipeline_mode=pl.Buffered(1)),  # W
            pl.BlockSpec((1, D), lambda i: (0, 0), pipeline_mode=pl.Buffered(1)),  # bias
        ]
        out_specs = pl.BlockSpec((tm, D), lambda i: (i, 0))
        scratch_shapes = []
        dim_sem = ("parallel",)
        kernel = functools.partial(_kernel_resident, eps=eps)
        vmem_est = est_r(tm)
    else:
        # K-tiling: tk is a 128-multiple divisor of D (D % 128 == 0 on this path).
        start = (min(max_k_tile, D) // 128) * 128
        tk_candidates = [t for t in range(start, 0, -128) if D % t == 0]
        tk = tk_candidates[0]

        def est_s(tm_, tk_):
            nk_ = D // tk_
            return (4 * tm_ * D * ito              # x + out tiles, double-buffered
                    + 2 * tk_ * D * itm            # W K-slab, double-buffered
                    + param_bytes                  # gamma / beta / bias
                    + (nk_ - 1) * tm_ * tk_ * itm  # LayerNorm(x) chunk scratch
                    + tm_ * D * 4)                 # f32 accumulator

        # Re-derive tiles from the budget (shrink tk first, then tm) instead of
        # clamping the VMEM limit and hoping.
        while est_s(tm, tk) > budget:
            smaller = [t for t in tk_candidates if t < tk]
            if smaller:
                tk = smaller[0]
            elif tm > 8:
                tm = max(8, _round_up(tm // 2, 8))
            else:
                break
        nk = D // tk
        if nk == 1:
            # Degenerates to the resident layout; route through that path.
            return sublayer_connection(x, gamma, beta, w, b, eps=eps,
                                       tile_rows=tile_rows, max_k_tile=max_k_tile,
                                       matmul_dtype=matmul_dtype, w_resident=True,
                                       vmem_budget_bytes=vmem_budget_bytes)
        grid = (_cdiv(N, tm), nk)
        in_specs = [
            pl.BlockSpec((tm, D), lambda i, k: (i, 0)),
            pl.BlockSpec((1, D), lambda i, k: (0, 0), pipeline_mode=pl.Buffered(1)),
            pl.BlockSpec((1, D), lambda i, k: (0, 0), pipeline_mode=pl.Buffered(1)),
            pl.BlockSpec((tk, D), lambda i, k: (k, 0)),   # W K-slab, streamed
            pl.BlockSpec((1, D), lambda i, k: (0, 0), pipeline_mode=pl.Buffered(1)),
        ]
        out_specs = pl.BlockSpec((tm, D), lambda i, k: (i, 0))
        scratch_shapes = [
            pltpu.VMEM((nk - 1, tm, tk), matmul_dtype),   # LN(x) chunks 1..nk-1
            pltpu.VMEM((tm, D), jnp.float32),             # matmul accumulator
        ]
        dim_sem = ("parallel", "arbitrary")
        kernel = functools.partial(_kernel_streamed, eps=eps)
        vmem_est = est_s(tm, tk)

    # Never below the default scoped limit, never above the per-generation budget.
    vmem_limit = int(min(budget, max(32 * 2 ** 20,
                                     _round_up(vmem_est * 5 // 4, 2 ** 20))))

    out = pl.pallas_call(
        kernel,
        out_shape=jax.ShapeDtypeStruct((N, D), x.dtype),
        grid_spec=pltpu.PrefetchScalarGridSpec(
            num_scalar_prefetch=0,
            grid=grid,
            in_specs=in_specs,
            out_specs=out_specs,
            scratch_shapes=scratch_shapes,
        ),
        compiler_params=pltpu.CompilerParams(
            dimension_semantics=dim_sem,
            vmem_limit_bytes=vmem_limit,
        ),
    )(x2, gamma2, beta2, w2, b2)

    return out.reshape(B, S, D)


# --------------------------------- self-test ----------------------------------

def _reference(x, gamma, beta, w, b, eps=1e-6):
    mean = jnp.mean(x, axis=-1, keepdims=True)
    std = jnp.sqrt(
        jnp.sum((x - mean) ** 2, axis=-1, keepdims=True) / (x.shape[-1] - 1))
    y = gamma * (x - mean) / (std + eps) + beta
    z = jnp.einsum("bsd,de->bse", y, w) + b
    return x + z


if __name__ == "__main__":
    root = jax.random.PRNGKey(0)

    def check(B, S, D, tag, atol=1e-4, rtol=1e-4, **kw):
        key = jax.random.fold_in(root, tag)
        kx, kw_, kb = jax.random.split(key, 3)
        x = jax.random.normal(kx, (B, S, D), dtype=jnp.float32)
        # LayerNorm params per module __init__: a_2 = ones, b_2 = zeros.
        gamma = jnp.ones((D,), dtype=jnp.float32)
        beta = jnp.zeros((D,), dtype=jnp.float32)
        # Deterministic synthetic sublayer (Linear D -> D).
        w = jax.random.normal(kw_, (D, D), dtype=jnp.float32) * 0.05
        b = jax.random.normal(kb, (D,), dtype=jnp.float32) * 0.05

        out = sublayer_connection(x, gamma, beta, w, b, **kw)
        out = jax.block_until_ready(out)
        ref = _reference(x, gamma, beta, w, b)
        assert out.shape == (B, S, D)
        assert jnp.allclose(out, ref, atol=atol, rtol=rtol), f"mismatch (tag={tag})"

    # Small lane-dense shape (D=128): W fully VMEM-resident, single grid axis.
    check(B=2, S=8, D=128, tag=0)
    # Forced W streaming: multi-row-tile + K accumulation + ragged last row tile
    # (N=46 not divisible by tm=16) handled in-kernel — no wrapper pad/slice.
    check(B=2, S=23, D=256, tag=1, tile_rows=16, max_k_tile=128, w_resident=False)
    # bf16 MXU path (recommended on v6e/v7x): LN stats / accumulator stay f32.
    check(B=2, S=8, D=128, tag=2, matmul_dtype=jnp.bfloat16, atol=3e-2, rtol=3e-2)

    print("KERNEL_OK")
</pallas_src>

<mosaic_0001>
module attributes {stable_mosaic.version = 11 : i64} {
  func.func @_kernel_resident(%arg0: i32, %arg1: memref<8x128xf32, #tpu.memory_space<vmem>>, %arg2: memref<1x128xf32, #tpu.memory_space<vmem>>, %arg3: memref<1x128xf32, #tpu.memory_space<vmem>>, %arg4: memref<128x128xf32, #tpu.memory_space<vmem>>, %arg5: memref<1x128xf32, #tpu.memory_space<vmem>>, %arg6: memref<8x128xf32, #tpu.memory_space<vmem>>) attributes {dimension_semantics = [#tpu.dimension_semantics<parallel>], iteration_bounds = array<i64: 2>, scalar_prefetch = 0 : i64, scratch_operands = 0 : i64, tpu.core_type = #tpu.core_type<tc>, window_params = [{transform_indices = @transform_0, window_bounds = array<i64: 8, 128>}, {pipeline_mode = #tpu.pipeline_mode<synchronous>, transform_indices = @transform_1, window_bounds = array<i64: 1, 128>}, {pipeline_mode = #tpu.pipeline_mode<synchronous>, transform_indices = @transform_2, window_bounds = array<i64: 1, 128>}, {pipeline_mode = #tpu.pipeline_mode<synchronous>, transform_indices = @transform_3, window_bounds = array<i64: 128, 128>}, {pipeline_mode = #tpu.pipeline_mode<synchronous>, transform_indices = @transform_4, window_bounds = array<i64: 1, 128>}, {transform_indices = @transform_5, window_bounds = array<i64: 8, 128>}]} {
    %c0 = arith.constant 0 : index
    %c0_0 = arith.constant 0 : index
    %0 = vector.load %arg1[%c0, %c0_0] : memref<8x128xf32, #tpu.memory_space<vmem>>, vector<8x128xf32>
    %c0_1 = arith.constant 0 : index
    %c0_2 = arith.constant 0 : index
    %1 = vector.load %arg2[%c0_1, %c0_2] : memref<1x128xf32, #tpu.memory_space<vmem>>, vector<1x128xf32>
    %c0_3 = arith.constant 0 : index
    %c0_4 = arith.constant 0 : index
    %2 = vector.load %arg3[%c0_3, %c0_4] : memref<1x128xf32, #tpu.memory_space<vmem>>, vector<1x128xf32>
    %cst = arith.constant dense<0.000000e+00> : vector<8xf32>
    %3 = vector.multi_reduction <add>, %0, %cst [1] : vector<8x128xf32> to vector<8xf32>
    %4 = vector.shape_cast %3 : vector<8xf32> to vector<8x1xf32>
    %cst_5 = arith.constant 1.280000e+02 : f32
    %5 = vector.broadcast %cst_5 : f32 to vector<8x1xf32>
    %6 = arith.divf %4, %5 : vector<8x1xf32>
    %7 = vector.broadcast %6 : vector<8x1xf32> to vector<8x128xf32>
    %8 = arith.subf %0, %7 : vector<8x128xf32>
    %9 = arith.mulf %8, %8 : vector<8x128xf32>
    %cst_6 = arith.constant dense<0.000000e+00> : vector<8xf32>
    %10 = vector.multi_reduction <add>, %9, %cst_6 [1] : vector<8x128xf32> to vector<8xf32>
    %11 = vector.shape_cast %10 : vector<8xf32> to vector<8x1xf32>
    %cst_7 = arith.constant 0.00787401571 : f32
    %12 = vector.broadcast %cst_7 : f32 to vector<8x1xf32>
    %13 = arith.mulf %11, %12 : vector<8x1xf32>
    %14 = math.sqrt %13 : vector<8x1xf32>
    %cst_8 = arith.constant 9.99999997E-7 : f32
    %15 = vector.broadcast %cst_8 : f32 to vector<8x1xf32>
    %16 = arith.addf %14, %15 : vector<8x1xf32>
    %17 = tpu.reciprocal %16 : vector<8x1xf32> -> vector<8x1xf32>
    %18 = vector.broadcast %1 : vector<1x128xf32> to vector<8x128xf32>
    %19 = arith.mulf %18, %8 : vector<8x128xf32>
    %20 = vector.broadcast %17 : vector<8x1xf32> to vector<8x128xf32>
    %21 = arith.mulf %19, %20 : vector<8x128xf32>
    %22 = vector.broadcast %2 : vector<1x128xf32> to vector<8x128xf32>
    %23 = arith.addf %21, %22 : vector<8x128xf32>
    %c0_9 = arith.constant 0 : index
    %c0_10 = arith.constant 0 : index
    %24 = vector.load %arg5[%c0_9, %c0_10] : memref<1x128xf32, #tpu.memory_space<vmem>>, vector<1x128xf32>
    %25 = vector.broadcast %24 : vector<1x128xf32> to vector<8x128xf32>
    %26 = arith.addf %0, %25 : vector<8x128xf32>
    %c0_11 = arith.constant 0 : index
    %c0_12 = arith.constant 0 : index
    %27 = vector.load %arg4[%c0_11, %c0_12] : memref<128x128xf32, #tpu.memory_space<vmem>>, vector<128x128xf32>
    %cst_13 = arith.constant dense<0.000000e+00> : vector<8x128xf32>
    %28 = tpu.matmul %23, %27, %cst_13 {dimension_numbers = #tpu.dot_dimension_numbers<[1], [0], [0], [1], [0, 0, 1, 1], [], []>} : vector<8x128xf32>, vector<128x128xf32>, vector<8x128xf32> -> vector<8x128xf32>
    %29 = arith.addf %26, %28 : vector<8x128xf32>
    %c0_14 = arith.constant 0 : index
    %c0_15 = arith.constant 0 : index
    %30 = vector.load %arg6[%c0_14, %c0_15] : memref<8x128xf32, #tpu.memory_space<vmem>>, vector<8x128xf32>
    tpu.vector_store %arg6[%c0_14, %c0_15], %29 {strides = array<i32>} : memref<8x128xf32, #tpu.memory_space<vmem>>, vector<8x128xf32>,
    return
  }
  func.func @transform_0(%arg0: i32) -> (i32, i32) {
    %c0_i32 = arith.constant 0 : i32
    %c0_i32_0 = arith.constant 0 : i32
    return %arg0, %c0_i32 : i32, i32
  }
  func.func @transform_1(%arg0: i32) -> (i32, i32) {
    %c0_i32 = arith.constant 0 : i32
    %c0_i32_0 = arith.constant 0 : i32
    %c0_i32_1 = arith.constant 0 : i32
    return %c0_i32, %c0_i32_0 : i32, i32
  }
  func.func @transform_2(%arg0: i32) -> (i32, i32) {
    %c0_i32 = arith.constant 0 : i32
    %c0_i32_0 = arith.constant 0 : i32
    %c0_i32_1 = arith.constant 0 : i32
    return %c0_i32, %c0_i32_0 : i32, i32
  }
  func.func @transform_3(%arg0: i32) -> (i32, i32) {
    %c0_i32 = arith.constant 0 : i32
    %c0_i32_0 = arith.constant 0 : i32
    %c0_i32_1 = arith.constant 0 : i32
    return %c0_i32, %c0_i32_0 : i32, i32
  }
  func.func @transform_4(%arg0: i32) -> (i32, i32) {
    %c0_i32 = arith.constant 0 : i32
    %c0_i32_0 = arith.constant 0 : i32
    %c0_i32_1 = arith.constant 0 : i32
    return %c0_i32, %c0_i32_0 : i32, i32
  }
  func.func @transform_5(%arg0: i32) -> (i32, i32) {
    %c0_i32 = arith.constant 0 : i32
    %c0_i32_0 = arith.constant 0 : i32
    return %arg0, %c0_i32 : i32, i32
  }
}

</mosaic_0001>

<llo_original>
// kernel: tpu_custom_call.1
$region0: #{tpu_custom_call.1}
  #allocation0 [shape = 'u32[]', space=smem, size = 0x4, offset = 0x4, fixed_abs, tag = 'smem constant byte address 0x4 - core index']
  #allocation1 [shape = 'u32[144,128]{1,0:T(1,128)}', space=vmem, size = 0x12000, scoped, tag = 'internal scratch']
  %s0 = inlined_call_operand.hbm [shape: f32[16,128], index: 0, kind: input, shape index: {}]
  %s1 = inlined_call_operand.vmem [shape: f32[1,128], index: 1, kind: input, shape index: {}]
  %s2 = inlined_call_operand.vmem [shape: f32[1,128], index: 2, kind: input, shape index: {}]
  %s3 = inlined_call_operand.hbm [shape: f32[128,128], index: 3, kind: input, shape index: {}]
  %s4 = inlined_call_operand.vmem [shape: f32[1,128], index: 4, kind: input, shape index: {}]
  %s5 = inlined_call_operand.hbm [shape: f32[16,128], index: 5, kind: output, shape index: {}]
  %s6 = sld [smem:[#allocation0]]
  $region61: #{tpu_custom_call.1} parent=0
    _
  %s8 = ssub.s32 1, %s6
  %s9 = scalar_select 0, %s8, %s6
  $region1: #{tpu_custom_call.1} parent=0
    #allocation2 [shape = 'u8[8192]{0}', space=vmem, size = 0x2000, scoped, tag = 'input window, operand 0']
    #allocation3 [shape = 's32[2]{0}', space=sflag, size = 0x8, scoped, tag = 'scoped memory for tpu_custom_call.1']
    #allocation4 [shape = 's32[2]{0}', space=sflag, size = 0x8, scoped, tag = 'scoped memory for tpu_custom_call.1']
    #allocation5 [shape = 'u8[65536]{0}', space=vmem, size = 0x10000, scoped, tag = 'input window, operand 3, single buffered']
    #allocation6 [shape = 's32[1]{0}', space=sflag, size = 0x4, scoped, tag = 'scoped memory for tpu_custom_call.1']
    #allocation7 [shape = 'u8[8192]{0}', space=vmem, size = 0x2000, scoped, tag = 'output window, operand 0']
    %10 = vsyncpa [#allocation3], 0
    %s11 = scalar_lea.sflag [#allocation3], 1
    %12 = vsyncpa %s11, 0
    %13 = vsyncpa [#allocation6], 0
    %14 = vsyncpa [#allocation4], 0
    %s15 = scalar_lea.sflag [#allocation4], 1
    %16 = vsyncpa %s15, 0
    loop: start=0, step=1, limit=4
    $region2: #{tpu_custom_call.1} parent=1 // loop_pre_header
      _
    $region3: #{tpu_custom_call.1} parent=1 // loop_header
      %s18 = sphi 0, %s22
      %p19 = scmp.ge.s32.totalorder %s18, 4
      %s28 = sphi 0, %s30
      %s31 = sphi 0, %s28
      %s32 = sphi 0, %s31
      %s48 = sphi 0, %s32
      %s52 = sphi 0, %s52
      %s54 = sphi 0, %s52
      %s55 = sphi 0, %s54
      %s69 = sphi 0, %s55
      %s73 = sphi 0, %s73
      %s75 = sphi 0, %s73
      %s76 = sphi 0, %s75
      %s90 = sphi 0, %s76
      %s94 = sphi 0, %s94
      %s96 = sphi 0, %s94
      %s97 = sphi 0, %s96
      %s111 = sphi 0, %s97
      %s115 = sphi 0, %s115
      %s117 = sphi 0, %s115
      %s118 = sphi 0, %s117
      %s132 = sphi 0, %s118
      %s138 = sphi 0, %s140
      %s141 = sphi 0, %s138
      %s142 = sphi 0, %s141
      %s158 = sphi 0, %s142
    $region4: #{tpu_custom_call.1} parent=1 // loop_header_branch
      %21 = sbr.rel (%p19) target = $region8
    $region5: #{tpu_custom_call.1} parent=1 // loop_body
      %s23 = ssub.s32 %s18, 1
      %s24 = ssub.s32 %s18, 2
      %s25 = sadd.s32 %s18, 1
      %s26 = ssub.s32 %s18, %s25
      %p27 = scmp.eq.s32.totalorder %s26, 0
      %s29 = sadd.s32 %s28, 1
      %s30 = scalar_select %p27, %s28, %s29
      %p33 = pneg %p27
      %p34 = scmp.eq.s32.totalorder %s18, 1
      %p35 = por %p33, %p34
      %p36 = scmp.ne.s32.totalorder %s28, %s31
      %p37 = scmp.eq.s32.totalorder %s18, 0
      %p38 = por %p36, %p37
      %p39 = scmp.ne.s32.totalorder %s28, %s31
      %p40 = scmp.eq.s32.totalorder %s23, 1
      %p41 = por %p39, %p40
      %p42 = scmp.ne.s32.totalorder %s31, %s32
      %p43 = scmp.eq.s32.totalorder %s23, 0
      %p44 = por %p42, %p43
      %p45 = scmp.ne.s32.totalorder %s31, %s32
      %p46 = scmp.eq.s32.totalorder %s24, 1
      %p47 = por %p45, %p46
      %p49 = scmp.ne.s32.totalorder %s32, %s48
      %p50 = scmp.eq.s32.totalorder %s24, 0
      %p51 = por %p49, %p50
      %s53 = sadd.s32 %s52, 1
      %p56 = scmp.eq.s32.totalorder %s18, 1
      %p57 = scmp.ne.s32.totalorder %s52, %s54
      %p58 = scmp.eq.s32.totalorder %s18, 0
      %p59 = por %p57, %p58
      %p60 = scmp.ne.s32.totalorder %s52, %s54
      %p61 = scmp.eq.s32.totalorder %s23, 1
      %p62 = por %p60, %p61
      %p63 = scmp.ne.s32.totalorder %s54, %s55
      %p64 = scmp.eq.s32.totalorder %s23, 0
      %p65 = por %p63, %p64
      %p66 = scmp.ne.s32.totalorder %s54, %s55
      %p67 = scmp.eq.s32.totalorder %s24, 1
      %p68 = por %p66, %p67
      %p70 = scmp.ne.s32.totalorder %s55, %s69
      %p71 = scmp.eq.s32.totalorder %s24, 0
      %p72 = por %p70, %p71
      %s74 = sadd.s32 %s73, 1
      %p77 = scmp.eq.s32.totalorder %s18, 1
      %p78 = scmp.ne.s32.totalorder %s73, %s75
      %p79 = scmp.eq.s32.totalorder %s18, 0
      %p80 = por %p78, %p79
      %p81 = scmp.ne.s32.totalorder %s73, %s75
      %p82 = scmp.eq.s32.totalorder %s23, 1
      %p83 = por %p81, %p82
      %p84 = scmp.ne.s32.totalorder %s75, %s76
      %p85 = scmp.eq.s32.totalorder %s23, 0
      %p86 = por %p84, %p85
      %p87 = scmp.ne.s32.totalorder %s75, %s76
      %p88 = scmp.eq.s32.totalorder %s24, 1
      %p89 = por %p87, %p88
      %p91 = scmp.ne.s32.totalorder %s76, %s90
      %p92 = scmp.eq.s32.totalorder %s24, 0
      %p93 = por %p91, %p92
      %s95 = sadd.s32 %s94, 1
      %p98 = scmp.eq.s32.totalorder %s18, 1
      %p99 = scmp.ne.s32.totalorder %s94, %s96
      %p100 = scmp.eq.s32.totalorder %s18, 0
      %p101 = por %p99, %p100
      %p102 = scmp.ne.s32.totalorder %s94, %s96
      %p103 = scmp.eq.s32.totalorder %s23, 1
      %p104 = por %p102, %p103
      %p105 = scmp.ne.s32.totalorder %s96, %s97
      %p106 = scmp.eq.s32.totalorder %s23, 0
      %p107 = por %p105, %p106
      %p108 = scmp.ne.s32.totalorder %s96, %s97
      %p109 = scmp.eq.s32.totalorder %s24, 1
      %p110 = por %p108, %p109
      %p112 = scmp.ne.s32.totalorder %s97, %s111
      %p113 = scmp.eq.s32.totalorder %s24, 0
      %p114 = por %p112, %p113
      %s116 = sadd.s32 %s115, 1
      %p119 = scmp.eq.s32.totalorder %s18, 1
      %p120 = scmp.ne.s32.totalorder %s115, %s117
      %p121 = scmp.eq.s32.totalorder %s18, 0
      %p122 = por %p120, %p121
      %p123 = scmp.ne.s32.totalorder %s115, %s117
      %p124 = scmp.eq.s32.totalorder %s23, 1
      %p125 = por %p123, %p124
      %p126 = scmp.ne.s32.totalorder %s117, %s118
      %p127 = scmp.eq.s32.totalorder %s23, 0
      %p128 = por %p126, %p127
      %p129 = scmp.ne.s32.totalorder %s117, %s118
      %p130 = scmp.eq.s32.totalorder %s24, 1
      %p131 = por %p129, %p130
      %p133 = scmp.ne.s32.totalorder %s118, %s132
      %p134 = scmp.eq.s32.totalorder %s24, 0
      %p135 = por %p133, %p134
      %s136 = ssub.s32 %s18, %s25
      %p137 = scmp.eq.s32.totalorder %s136, 0
      %s139 = sadd.s32 %s138, 1
      %s140 = scalar_select %p137, %s138, %s139
      %p143 = pneg %p137
      %p144 = scmp.eq.s32.totalorder %s18, 1
      %p145 = por %p143, %p144
      %p146 = scmp.ne.s32.totalorder %s138, %s141
      %p147 = scmp.eq.s32.totalorder %s18, 0
      %p148 = por %p146, %p147
      %p149 = scmp.ne.s32.totalorder %s138, %s141
      %p150 = scmp.eq.s32.totalorder %s23, 1
      %p151 = por %p149, %p150
      %p152 = scmp.ne.s32.totalorder %s141, %s142
      %p153 = scmp.eq.s32.totalorder %s23, 0
      %p154 = por %p152, %p153
      %p155 = scmp.ne.s32.totalorder %s141, %s142
      %p156 = scmp.eq.s32.totalorder %s24, 1
      %p157 = por %p155, %p156
      %p159 = scmp.ne.s32.totalorder %s142, %s158
      %p160 = scmp.eq.s32.totalorder %s24, 0
      %p161 = por %p159, %p160
      %p162 = scmp.le.s32.totalorder 1, %s18
      %p163 = scmp.lt.s32.totalorder %s18, 3
      %p164 = pnand %p162, %p163
      %p165 = pneg %p164
      // Predicated region
      $region9: #{tpu_custom_call.1} parent=5 // pred_check
        _
      $region10: #{tpu_custom_call.1} parent=5 // pred_check_branch
        %167 = sbr.rel (%p164) target = $region12
      $region11: #{tpu_custom_call.1} parent=5 // pred_region
        %s168 = ssub.s32 %s18, 1
        // Predicated region
        $region13: #{tpu_custom_call.1} parent=11 // pred_check
          %p169 = pneg %p65
        $region14: #{tpu_custom_call.1} parent=11 // pred_check_branch
          %171 = sbr.rel (%p169) target = $region16
        $region15: #{tpu_custom_call.1} parent=11 // pred_region
          _
        $region16: #{tpu_custom_call.1} parent=11 // pred_fallthru
          _
        // Predicated region
        $region17: #{tpu_custom_call.1} parent=11 // pred_check
          %p172 = pneg %p86
        $region18: #{tpu_custom_call.1} parent=11 // pred_check_branch
          %174 = sbr.rel (%p172) target = $region20
        $region19: #{tpu_custom_call.1} parent=11 // pred_region
          _
        $region20: #{tpu_custom_call.1} parent=11 // pred_fallthru
          _
        // Predicated region
        $region21: #{tpu_custom_call.1} parent=11 // pred_check
          %p175 = pneg %p107
        $region22: #{tpu_custom_call.1} parent=11 // pred_check_branch
          %177 = sbr.rel (%p175) target = $region24
        $region23: #{tpu_custom_call.1} parent=11 // pred_region
          %s179 = ssub.s32 2048, 2048
          %180 = vsyncadd [#allocation6], %s179
          %s181 = sshll.u32 [#allocation5], 4
          %s182 = int_to_ptr.vmem [resolvable:$true] %s181
          %187 = dma.hbm_to_vmem [thread:$0]  %s3, 2048, %s182, [#allocation6], 128, 128, 8
        $region24: #{tpu_custom_call.1} parent=11 // pred_fallthru
          _
        // Predicated region
        $region25: #{tpu_custom_call.1} parent=11 // pred_check
          %p188 = pneg %p128
        $region26: #{tpu_custom_call.1} parent=11 // pred_check_branch
          %190 = sbr.rel (%p188) target = $region28
        $region27: #{tpu_custom_call.1} parent=11 // pred_region
          _
        $region28: #{tpu_custom_call.1} parent=11 // pred_fallthru
          _
      $region12: #{tpu_custom_call.1} parent=5 // pred_fallthru
        _
      %p191 = scmp.lt.s32.totalorder %s18, 2
      // Predicated region
      $region29: #{tpu_custom_call.1} parent=5 // pred_check
        %p192 = pneg %p191
      $region30: #{tpu_custom_call.1} parent=5 // pred_check_branch
        %194 = sbr.rel (%p192) target = $region32
      $region31: #{tpu_custom_call.1} parent=5 // pred_region
        // Predicated region
        $region33: #{tpu_custom_call.1} parent=31 // pred_check
          %p195 = pneg %p38
        $region34: #{tpu_custom_call.1} parent=31 // pred_check_branch
          %197 = sbr.rel (%p195) target = $region36
        $region35: #{tpu_custom_call.1} parent=31 // pred_region
          %s198 = sand.u32 %s28, 1
          %s199 = scalar_lea.sflag [#allocation3], %s198
          %s200 = sand.u32 %s28, 1
          %s201 = smul.addr %s200, 8
          %s202 = scalar_lea.vmem [#allocation2], %s201
          %s204 = ssub.s32 128, 128
          %205 = vsyncadd %s199, %s204
          %s206 = smul.addr %s18, 128
          %s207 = scalar_lea.hbm %s0, %s206
          %s209 = sshll.u32 %s202, 4
          %s210 = int_to_ptr.vmem [resolvable:$true] %s209
          %212 = dma.hbm_to_vmem [thread:$0]  %s207, 128, %s210, %s199
        $region36: #{tpu_custom_call.1} parent=31 // pred_fallthru
          _
      $region32: #{tpu_custom_call.1} parent=5 // pred_fallthru
        _
      %p213 = scmp.le.s32.totalorder 1, %s18
      %p214 = scmp.lt.s32.totalorder %s18, 3
      %p215 = pnand %p213, %p214
      %p216 = pneg %p215
      // Predicated region
      $region37: #{tpu_custom_call.1} parent=5 // pred_check
        _
      $region38: #{tpu_custom_call.1} parent=5 // pred_check_branch
        %218 = sbr.rel (%p215) target = $region40
      $region39: #{tpu_custom_call.1} parent=5 // pred_region
        %s219 = ssub.s32 %s18, 1
        %s220 = sand.u32 %s31, 1
        %s221 = scalar_lea.sflag [#allocation3], %s220
        %s222 = sand.u32 %s31, 1
        %s223 = smul.addr %s222, 8
        %s224 = scalar_lea.vmem [#allocation2], %s223
        // Predicated region
        $region41: #{tpu_custom_call.1} parent=39 // pred_check
          %p225 = pneg %p44
        $region42: #{tpu_custom_call.1} parent=39 // pred_check_branch
          %227 = sbr.rel (%p225) target = $region44
        $region43: #{tpu_custom_call.1} parent=39 // pred_region
          %228 = dma.done %s221, 128
        $region44: #{tpu_custom_call.1} parent=39 // pred_fallthru
          _
        // Predicated region
        $region45: #{tpu_custom_call.1} parent=39 // pred_check
          %p229 = pneg %p107
        $region46: #{tpu_custom_call.1} parent=39 // pred_check_branch
          %231 = sbr.rel (%p229) target = $region48
        $region47: #{tpu_custom_call.1} parent=39 // pred_region
          %232 = dma.done [#allocation6], 2048
        $region48: #{tpu_custom_call.1} parent=39 // pred_fallthru
          _
        %s233 = sand.u32 %s31, 1
        %s234 = scalar_lea.sflag [#allocation3], %s233
        %s235 = sand.u32 %s31, 1
        %s236 = smul.addr %s235, 8
        %s237 = scalar_lea.vmem [#allocation2], %s236
        %p238 = pneg %p44
        %p239 = pneg %p41
        %p240 = pneg %p65
        %p241 = pneg %p62
        %p242 = pneg %p86
        %p243 = pneg %p83
        %p244 = pneg %p107
        %p245 = pneg %p104
        %p246 = pneg %p128
        %p247 = pneg %p125
        %p248 = pneg %p154
        %p249 = pneg %p151
        %s250 = sand.u32 %s141, 1
        %s251 = scalar_lea.sflag [#allocation4], %s250
        %s252 = sand.u32 %s141, 1
        %s253 = smul.addr %s252, 8
        %s254 = scalar_lea.vmem [#allocation7], %s253
        %v255 = vld [vmem:[%s224] sm:$0xff]
        %v256 = vld [vmem:[%s1] sm:$0x1]
        %v257 = vld [vmem:[%s2] sm:$0x1]
        %258 = vadd.xlane.f32.xlu0 %v255
        %v259 = vpop.xlane.xlu0 %258
        %v260 = vrcp.pop 128.0
        %v261 = vmul.f32 %v259, %v260
        %v262 = vsub.f32 %v255, %v261
        %v263 = vmul.f32 %v262, %v262
        %264 = vadd.xlane.f32.xlu0 %v263
        %v265 = vpop.xlane.xlu0 %264
        %v266 = vmul.f32 %v265, 0.007874016
        %v267 = vrsqrt.pop %v266
        %v268 = vmul.f32 %v266, %v267
        %vm269 = vcmp.eq.f32.partialorder %v266, inf
        %v270 = vsel %vm269, %v266, %v268
        %vm271 = vcmp.eq.f32.partialorder %v266, 0.0
        %v272 = vand.u32 %v266, 2147483648
        %v273 = vsel %vm271, %v272, %v270
        %v274 = vadd.f32 %v273, 1e-06
        %v275 = vrcp.pop %v274
        %v277 = vlaneseq
        %v278 = vshrl.u32 %v277, 7
        %v279 = vsub.s32 0, %v278
        %v280 = vrot.slane %v256, %v279
        %v282 = vmul.f32 %v280, %v262
        %v283 = vmul.f32 %v282, %v275
        %v285 = vlaneseq
        %v286 = vshrl.u32 %v285, 7
        %v287 = vsub.s32 0, %v286
        %v288 = vrot.slane %v257, %v287
        %v290 = vadd.f32 %v283, %v288
        %v291 = vld [vmem:[%s4] sm:$0x1]
        %v293 = vlaneseq
        %v294 = vshrl.u32 %v293, 7
        %v295 = vsub.s32 0, %v294
        %v296 = vrot.slane %v291, %v295
        %v298 = vadd.f32 %v255, %v296
        %v299 = vld [vmem:[#allocation5] sm:$0xff]
        %v300 = vld [vmem:[#allocation5 + $0x8] sm:$0xff]
        %v301 = vld [vmem:[#allocation5 + $0x10] sm:$0xff]
        %v302 = vld [vmem:[#allocation5 + $0x18] sm:$0xff]
        %v303 = vld [vmem:[#allocation5 + $0x20] sm:$0xff]
        %v304 = vld [vmem:[#allocation5 + $0x28] sm:$0xff]
        %v305 = vld [vmem:[#allocation5 + $0x30] sm:$0xff]
        %v306 = vld [vmem:[#allocation5 + $0x38] sm:$0xff]
        %v307 = vld [vmem:[#allocation5 + $0x40] sm:$0xff]
        %v308 = vld [vmem:[#allocation5 + $0x48] sm:$0xff]
        %v309 = vld [vmem:[#allocation5 + $0x50] sm:$0xff]
        %v310 = vld [vmem:[#allocation5 + $0x58] sm:$0xff]
        %v311 = vld [vmem:[#allocation5 + $0x60] sm:$0xff]
        %v312 = vld [vmem:[#allocation5 + $0x68] sm:$0xff]
        %v313 = vld [vmem:[#allocation5 + $0x70] sm:$0xff]
        %v314 = vld [vmem:[#allocation5 + $0x78] sm:$0xff]
        %315 = vmatprep.subr.mxu0 0.0
        %316 = vmatpush1.msra.mxu0 %v314
        %317 = vmatprep.subr.mxu0 0.0
        %318 = vmatpush1.msra.mxu0 %v313
        %319 = vmatprep.subr.mxu0 0.0
        %320 = vmatpush1.msra.mxu0 %v312
        %321 = vmatprep.subr.mxu0 0.0
        %322 = vmatpush1.msra.mxu0 %v311
        %323 = vmatprep.subr.mxu0 0.0
        %324 = vmatpush1.msra.mxu0 %v310
        %325 = vmatprep.subr.mxu0 0.0
        %326 = vmatpush1.msra.mxu0 %v309
        %327 = vmatprep.subr.mxu0 0.0
        %328 = vmatpush1.msra.mxu0 %v308
        %329 = vmatprep.subr.mxu0 0.0
        %330 = vmatpush1.msra.mxu0 %v307
        %331 = vmatprep.subr.mxu0 0.0
        %332 = vmatpush1.msra.mxu0 %v306
        %333 = vmatprep.subr.mxu0 0.0
        %334 = vmatpush1.msra.mxu0 %v305
        %335 = vmatprep.subr.mxu0 0.0
        %336 = vmatpush1.msra.mxu0 %v304
        %337 = vmatprep.subr.mxu0 0.0
        %338 = vmatpush1.msra.mxu0 %v303
        %339 = vmatprep.subr.mxu0 0.0
        %340 = vmatpush1.msra.mxu0 %v302
        %341 = vmatprep.subr.mxu0 0.0
        %342 = vmatpush1.msra.mxu0 %v301
        %343 = vmatprep.subr.mxu0 0.0
        %344 = vmatpush1.msra.mxu0 %v300
        %345 = vmatprep.subr.mxu0 0.0
        %346 = vmatpush1.msra.mxu0 %v299
        %347 = vmatprep.subr.mxu0 0.0
        %348 = vmatpush2.msra.mxu0 0.0
        %349 = vmatprep.subr.mxu0 0.0
        %350 = vmatpush2.msra.mxu0 0.0
        %351 = vmatprep.subr.mxu0 0.0
        %352 = vmatpush2.msra.mxu0 0.0
        %353 = vmatprep.subr.mxu0 0.0
        %354 = vmatpush2.msra.mxu0 0.0
        %355 = vmatprep.subr.mxu0 0.0
        %356 = vmatpush2.msra.mxu0 0.0
        %357 = vmatprep.subr.mxu0 0.0
        %358 = vmatpush2.msra.mxu0 0.0
        %359 = vmatprep.subr.mxu0 0.0
        %360 = vmatpush2.msra.mxu0 0.0
        %361 = vmatprep.subr.mxu0 0.0
        %362 = vmatpush2.msra.mxu0 0.0
        %363 = vmatprep.subr.mxu0 0.0
        %364 = vmatpush2.msra.mxu0 0.0
        %365 = vmatprep.subr.mxu0 0.0
        %366 = vmatpush2.msra.mxu0 0.0
        %367 = vmatprep.subr.mxu0 0.0
        %368 = vmatpush2.msra.mxu0 0.0
        %369 = vmatprep.subr.mxu0 0.0
        %370 = vmatpush2.msra.mxu0 0.0
        %371 = vmatprep.subr.mxu0 0.0
        %372 = vmatpush2.msra.mxu0 0.0
        %373 = vmatprep.subr.mxu0 0.0
        %374 = vmatpush2.msra.mxu0 0.0
        %375 = vmatprep.subr.mxu0 0.0
        %376 = vmatpush2.msra.mxu0 0.0
        %377 = vmatprep.subr.mxu0 0.0
        %378 = vmatpush2.msra.mxu0 0.0
        %379 = vmatprep.mubr.f32.mxu0 0.0
        %380 = vmatmul.mubr.f32.gmra.mxu0 %v290
        %v381 = vpop.f32.mrf.mxu0
        %v382 = vadd.f32 0.0, %v381
        %v383 = vpop.f32.mrf.mxu0
        %384 = vdwg.mxu0
        %v385 = vadd.f32 %v298, %v382
        %386 = vst [vmem:[%s254] sm:$0xff] %v385
        %s387 = sand.u32 %s141, 1
        %s388 = scalar_lea.sflag [#allocation4], %s387
        %s389 = sand.u32 %s141, 1
        %s390 = smul.addr %s389, 8
        %s391 = scalar_lea.vmem [#allocation7], %s390
        // Predicated region
        $region49: #{tpu_custom_call.1} parent=39 // pred_check
          %p392 = pneg %p151
        $region50: #{tpu_custom_call.1} parent=39 // pred_check_branch
          %394 = sbr.rel (%p392) target = $region52
        $region51: #{tpu_custom_call.1} parent=39 // pred_region
          %s396 = ssub.s32 128, 128
          %397 = vsyncadd %s388, %s396
          %s398 = smul.addr %s23, 128
          %s399 = scalar_lea.hbm %s5, %s398
          %s401 = sshll.u32 %s391, 4
          %s402 = int_to_ptr.vmem [resolvable:$true] %s401
          %404 = dma.vmem_to_hbm [thread:$0]  %s402, 128, %s399, %s388
        $region52: #{tpu_custom_call.1} parent=39 // pred_fallthru
          _
      $region40: #{tpu_custom_call.1} parent=5 // pred_fallthru
        _
      %p405 = scmp.le.s32.totalorder 2, %s18
      // Predicated region
      $region53: #{tpu_custom_call.1} parent=5 // pred_check
        %p406 = pneg %p405
      $region54: #{tpu_custom_call.1} parent=5 // pred_check_branch
        %408 = sbr.rel (%p406) target = $region56
      $region55: #{tpu_custom_call.1} parent=5 // pred_region
        %s409 = ssub.s32 %s18, 2
        // Predicated region
        $region57: #{tpu_custom_call.1} parent=55 // pred_check
          %p410 = pneg %p157
        $region58: #{tpu_custom_call.1} parent=55 // pred_check_branch
          %412 = sbr.rel (%p410) target = $region60
        $region59: #{tpu_custom_call.1} parent=55 // pred_region
          %s413 = sand.u32 %s142, 1
          %s414 = scalar_lea.sflag [#allocation4], %s413
          %s415 = sand.u32 %s142, 1
          %s416 = smul.addr %s415, 8
          %s417 = scalar_lea.vmem [#allocation7], %s416
          %418 = dma.done %s414, 128
        $region60: #{tpu_custom_call.1} parent=55 // pred_fallthru
          _
      $region56: #{tpu_custom_call.1} parent=5 // pred_fallthru
        _
    $region6: #{tpu_custom_call.1} parent=1 // loop_footer
      %s22 = sadd.s32 1, %s18
    $region7: #{tpu_custom_call.1} parent=1 // loop_footer_branch
      %17 = sbr.rel target = $region3
    $region8: #{tpu_custom_call.1} parent=1 // loop_exit
      _
    %419 = vsyncpa [#allocation3], 1
    %s420 = scalar_lea.sflag [#allocation3], 1
    %421 = vsyncpa %s420, 1
    %422 = vsyncpa [#allocation6], 1
    %423 = vsyncpa [#allocation4], 1
    %s424 = scalar_lea.sflag [#allocation4], 1
    %425 = vsyncpa %s424, 1

</llo_original>
